<compile_context>
chip_gen: v7x
topology: tpu7x:2x2x1
jax: 0.10.0
libtpu: 0.0.40
codegen_flags: <defaults>
</compile_context>

<pallas_src>
import math

import jax
import jax.numpy as jnp
from jax import lax
from jax.experimental import pallas as pl
from jax.experimental.pallas import tpu as pltpu


_SQRT_2_OVER_PI = math.sqrt(2.0 / math.pi)


def _gelu_tanh(x):
    # tanh-approx GELU: transcendental goes to the EUP slot (co-issues with
    # VALU/MXU work) instead of the VALU-only erf polynomial.
    return 0.5 * x * (1.0 + jnp.tanh(_SQRT_2_OVER_PI * (x + 0.044715 * (x * x * x))))


def _gelu_exact(x):
    # PyTorch nn.GELU() default (exact, erf-based) -- used only by the reference.
    return 0.5 * x * (1.0 + lax.erf(x * (1.0 / math.sqrt(2.0))))


def _round_up(n, m):
    return ((n + m - 1) // m) * m


def net_kernel(x_ref, w1_ref, b1_ref, w2_ref, b2_ref, wf_ref, bf_ref, out_ref):
    x_bf = x_ref[...]                        # [TB, D] bf16 (streamed tile)
    x = x_bf.astype(jnp.float32)             # f32 for the skip additions

    # fc1 (bf16 MXU operands, f32 accumulation) + GELU + skip
    h1 = jnp.dot(x_bf, w1_ref[...],
                 preferred_element_type=jnp.float32) + b1_ref[...]
    h1 = _gelu_tanh(h1)                      # dropout1 == identity (eval)
    x_out = h1 + x                           # desc_skip_connection

    # fc2 + GELU
    h2 = jnp.dot(x_out.astype(jnp.bfloat16), w2_ref[...],
                 preferred_element_type=jnp.float32) + b2_ref[...]
    h2 = _gelu_tanh(h2)                      # dropout2 == identity (eval)

    # final(z + x_out), lane-dense padded width -> unmasked vst
    z = h2 + x_out
    out = jnp.dot(z.astype(jnp.bfloat16), wf_ref[...],
                  preferred_element_type=jnp.float32) + bf_ref[...]
    out_ref[...] = out.astype(out_ref.dtype)


def net_forward(x, params, *, tb=512):
    """x: [B, D] float32.  params: dict of f32 weights/biases (see init_params).

    tb: target batch tile (rows). 512 amortizes the ~0.35 us per-grid-step
    overhead and keeps HBM streaming efficient. The working set (double-buffered
    bf16 x/out tiles + single-copy resident weights) is computed below and passed
    as vmem_limit_bytes, so it also fits v5e's 16 MiB scoped default and v7x's
    64 MiB physical VMEM.
    """
    B, D = x.shape
    C = params["wf"].shape[1]

    # Lane-dense padded output width (multiple of 128) -> unmasked stores.
    Cp = _round_up(max(C, 128), 128)

    # Batch tiling: multiples of 16 (bf16 sublane packing); cap the tile at half
    # the padded batch so the grid has >= 2 steps whenever possible, letting the
    # "parallel" batch axis shard across both TensorCores on v7x.
    SUB = 16
    B16 = _round_up(B, SUB)
    TB = max(SUB, min(tb, _round_up(pl.cdiv(B16, 2), SUB)))
    Bp = _round_up(B16, TB)
    nb = Bp // TB

    # Stream x as bf16 (it feeds the MXU as bf16 anyway): halves DMA + VMEM.
    x_p = jnp.pad(x, ((0, Bp - B), (0, 0))).astype(jnp.bfloat16)

    # bf16 weights for the MXU (and half the DMA bytes); f32 biases.
    w1 = params["w1"].astype(jnp.bfloat16)
    w2 = params["w2"].astype(jnp.bfloat16)
    wf = jnp.pad(params["wf"], ((0, 0), (0, Cp - C))).astype(jnp.bfloat16)
    b1 = params["b1"]
    b2 = params["b2"]
    bf = jnp.pad(params["bf"], ((0, 0), (0, Cp - C)))

    # Weights/biases: whole-array VMEM residency (single copy, no pipeline
    # double-buffer -- their block never changes across the grid).
    resident = pl.BlockSpec(memory_space=pltpu.MemorySpace.VMEM)

    # Explicit scoped-VMEM budget: double-buffered x/out tiles + resident
    # weights + headroom for Mosaic internal scratch.
    vmem_need = (2 * TB * D * 2              # x tile (bf16) x 2 buffers
                 + 2 * TB * Cp * 2           # out tile (bf16) x 2 buffers
                 + (2 * D * D + D * Cp) * 2  # w1, w2, wf (bf16), single copy
                 + (2 * D + Cp) * 4)         # b1, b2, bf (f32)
    vmem_limit = int(min(vmem_need + (8 << 20), 48 << 20))

    flops = 2 * Bp * D * (2 * D + Cp)
    transcendentals = 2 * Bp * D             # two tanh-GELUs over [Bp, D]
    bytes_accessed = (x_p.size * 2 + Bp * Cp * 2
                      + w1.size * 2 + w2.size * 2 + wf.size * 2
                      + b1.size * 4 + b2.size * 4 + bf.size * 4)

    out_p = pl.pallas_call(
        net_kernel,
        out_shape=jax.ShapeDtypeStruct((Bp, Cp), jnp.bfloat16),
        grid=(nb,),
        in_specs=[
            pl.BlockSpec((TB, D), lambda i: (i, 0)),   # x: streamed per tile
            resident,                                  # w1
            resident,                                  # b1
            resident,                                  # w2
            resident,                                  # b2
            resident,                                  # wf (padded)
            resident,                                  # bf (padded)
        ],
        out_specs=pl.BlockSpec((TB, Cp), lambda i: (i, 0)),
        compiler_params=pltpu.CompilerParams(
            dimension_semantics=("parallel",),         # megacore on v7x
            vmem_limit_bytes=vmem_limit),
        cost_estimate=pl.CostEstimate(
            flops=flops,
            transcendentals=transcendentals,
            bytes_accessed=bytes_accessed),
    )(x_p, w1, b1, w2, b2, wf, bf)

    return out_p[:B, :C].astype(jnp.float32)


def init_params(key, smiles_embed_dim, num_classes):
    """Deterministic init mimicking nn.Linear's uniform(-1/sqrt(fan_in), 1/sqrt(fan_in))."""
    D, C = smiles_embed_dim, num_classes
    ks = jax.random.split(key, 6)
    bound = 1.0 / math.sqrt(D)
    u = lambda k, shape, b: jax.random.uniform(k, shape, jnp.float32, -b, b)
    return {
        "w1": u(ks[0], (D, D), bound),
        "b1": u(ks[1], (1, D), bound),
        "w2": u(ks[2], (D, D), bound),
        "b2": u(ks[3], (1, D), bound),
        "wf": u(ks[4], (D, C), bound),
        "bf": u(ks[5], (1, C), bound),
    }


def net_reference(x, params):
    """Pure-JAX f32 reference (exact erf GELU, torch parity) for validation."""
    h1 = _gelu_exact(x @ params["w1"] + params["b1"])
    x_out = h1 + x
    h2 = _gelu_exact(x_out @ params["w2"] + params["b2"])
    z = h2 + x_out
    return z @ params["wf"] + params["bf"]


if __name__ == "__main__":
    D, C = 32, 2  # smiles_embed_dim, num_classes

    key = jax.random.PRNGKey(0)
    k_x, k_p, k_x2 = jax.random.split(key, 3)
    params = init_params(k_p, D, C)

    # Tolerance covers bf16 MXU operands (f32 accumulation), bf16 x/out
    # streaming, and tanh-approx GELU vs torch's exact erf GELU.
    atol = rtol = 3e-2

    # Case 1: single-tile batch (B=8 -> one padded 16-row tile).
    B1 = 8
    x1 = jax.random.normal(k_x, (B1, D), jnp.float32)
    out1 = jax.block_until_ready(net_forward(x1, params))
    ref1 = net_reference(x1, params)
    assert out1.shape == (B1, C)
    assert jnp.allclose(out1, ref1, atol=atol, rtol=rtol), "Pallas mismatch (case 1)"

    # Case 2: multi-tile grid with batch padding (B=20, tile=16 -> 2 grid steps).
    B2 = 20
    x2 = jax.random.normal(k_x2, (B2, D), jnp.float32)
    out2 = jax.block_until_ready(net_forward(x2, params, tb=16))
    ref2 = net_reference(x2, params)
    assert out2.shape == (B2, C)
    assert jnp.allclose(out2, ref2, atol=atol, rtol=rtol), "Pallas mismatch (case 2)"

    print("KERNEL_OK")
</pallas_src>

<mosaic_0001>
module attributes {stable_mosaic.version = 11 : i64} {
  func.func @net_kernel(%arg0: i32, %arg1: memref<16x32xbf16, #tpu.memory_space<vmem>>, %arg2: memref<32x32xbf16, #tpu.memory_space<vmem>>, %arg3: memref<1x32xf32, #tpu.memory_space<vmem>>, %arg4: memref<32x32xbf16, #tpu.memory_space<vmem>>, %arg5: memref<1x32xf32, #tpu.memory_space<vmem>>, %arg6: memref<32x128xbf16, #tpu.memory_space<vmem>>, %arg7: memref<1x128xf32, #tpu.memory_space<vmem>>, %arg8: memref<16x128xbf16, #tpu.memory_space<vmem>>) attributes {dimension_semantics = [#tpu.dimension_semantics<parallel>], iteration_bounds = array<i64: 1>, scalar_prefetch = 0 : i64, scratch_operands = 0 : i64, tpu.core_type = #tpu.core_type<tc>, window_params = [{transform_indices = @transform_0, window_bounds = array<i64: 16, 32>}, {pipeline_mode = #tpu.pipeline_mode<synchronous>, transform_indices = @transform_1, window_bounds = array<i64: 32, 32>}, {pipeline_mode = #tpu.pipeline_mode<synchronous>, transform_indices = @transform_2, window_bounds = array<i64: 1, 32>}, {pipeline_mode = #tpu.pipeline_mode<synchronous>, transform_indices = @transform_3, window_bounds = array<i64: 32, 32>}, {pipeline_mode = #tpu.pipeline_mode<synchronous>, transform_indices = @transform_4, window_bounds = array<i64: 1, 32>}, {pipeline_mode = #tpu.pipeline_mode<synchronous>, transform_indices = @transform_5, window_bounds = array<i64: 32, 128>}, {pipeline_mode = #tpu.pipeline_mode<synchronous>, transform_indices = @transform_6, window_bounds = array<i64: 1, 128>}, {transform_indices = @transform_7, window_bounds = array<i64: 16, 128>}]} {
    %c0 = arith.constant 0 : index
    %c0_0 = arith.constant 0 : index
    %0 = vector.load %arg1[%c0, %c0_0] : memref<16x32xbf16, #tpu.memory_space<vmem>>, vector<16x32xbf16>
    %1 = arith.extf %0 : vector<16x32xbf16> to vector<16x32xf32>
    %c0_1 = arith.constant 0 : index
    %c0_2 = arith.constant 0 : index
    %2 = vector.load %arg2[%c0_1, %c0_2] : memref<32x32xbf16, #tpu.memory_space<vmem>>, vector<32x32xbf16>
    %cst = arith.constant dense<0.000000e+00> : vector<16x32xf32>
    %3 = tpu.matmul %0, %2, %cst {dimension_numbers = #tpu.dot_dimension_numbers<[1], [0], [0], [1], [0, 0, 1, 1], [], []>} : vector<16x32xbf16>, vector<32x32xbf16>, vector<16x32xf32> -> vector<16x32xf32>
    %c0_3 = arith.constant 0 : index
    %c0_4 = arith.constant 0 : index
    %4 = vector.load %arg3[%c0_3, %c0_4] : memref<1x32xf32, #tpu.memory_space<vmem>>, vector<1x32xf32>
    %5 = vector.broadcast %4 : vector<1x32xf32> to vector<16x32xf32>
    %6 = arith.addf %3, %5 : vector<16x32xf32>
    %cst_5 = arith.constant 5.000000e-01 : f32
    %7 = vector.broadcast %cst_5 : f32 to vector<16x32xf32>
    %8 = arith.mulf %7, %6 : vector<16x32xf32>
    %9 = arith.mulf %6, %6 : vector<16x32xf32>
    %10 = arith.mulf %9, %6 : vector<16x32xf32>
    %cst_6 = arith.constant 4.471500e-02 : f32
    %11 = vector.broadcast %cst_6 : f32 to vector<16x32xf32>
    %12 = arith.mulf %11, %10 : vector<16x32xf32>
    %13 = arith.addf %6, %12 : vector<16x32xf32>
    %cst_7 = arith.constant 0.797884583 : f32
    %14 = vector.broadcast %cst_7 : f32 to vector<16x32xf32>
    %15 = arith.mulf %14, %13 : vector<16x32xf32>
    %16 = math.tanh %15 : vector<16x32xf32>
    %cst_8 = arith.constant 1.000000e+00 : f32
    %17 = vector.broadcast %cst_8 : f32 to vector<16x32xf32>
    %18 = arith.addf %17, %16 : vector<16x32xf32>
    %19 = arith.mulf %8, %18 : vector<16x32xf32>
    %20 = arith.addf %19, %1 : vector<16x32xf32>
    %21 = arith.truncf %20 : vector<16x32xf32> to vector<16x32xbf16>
    %c0_9 = arith.constant 0 : index
    %c0_10 = arith.constant 0 : index
    %22 = vector.load %arg4[%c0_9, %c0_10] : memref<32x32xbf16, #tpu.memory_space<vmem>>, vector<32x32xbf16>
    %cst_11 = arith.constant dense<0.000000e+00> : vector<16x32xf32>
    %23 = tpu.matmul %21, %22, %cst_11 {dimension_numbers = #tpu.dot_dimension_numbers<[1], [0], [0], [1], [0, 0, 1, 1], [], []>} : vector<16x32xbf16>, vector<32x32xbf16>, vector<16x32xf32> -> vector<16x32xf32>
    %c0_12 = arith.constant 0 : index
    %c0_13 = arith.constant 0 : index
    %24 = vector.load %arg5[%c0_12, %c0_13] : memref<1x32xf32, #tpu.memory_space<vmem>>, vector<1x32xf32>
    %25 = vector.broadcast %24 : vector<1x32xf32> to vector<16x32xf32>
    %26 = arith.addf %23, %25 : vector<16x32xf32>
    %cst_14 = arith.constant 5.000000e-01 : f32
    %27 = vector.broadcast %cst_14 : f32 to vector<16x32xf32>
    %28 = arith.mulf %27, %26 : vector<16x32xf32>
    %29 = arith.mulf %26, %26 : vector<16x32xf32>
    %30 = arith.mulf %29, %26 : vector<16x32xf32>
    %cst_15 = arith.constant 4.471500e-02 : f32
    %31 = vector.broadcast %cst_15 : f32 to vector<16x32xf32>
    %32 = arith.mulf %31, %30 : vector<16x32xf32>
    %33 = arith.addf %26, %32 : vector<16x32xf32>
    %cst_16 = arith.constant 0.797884583 : f32
    %34 = vector.broadcast %cst_16 : f32 to vector<16x32xf32>
    %35 = arith.mulf %34, %33 : vector<16x32xf32>
    %36 = math.tanh %35 : vector<16x32xf32>
    %cst_17 = arith.constant 1.000000e+00 : f32
    %37 = vector.broadcast %cst_17 : f32 to vector<16x32xf32>
    %38 = arith.addf %37, %36 : vector<16x32xf32>
    %39 = arith.mulf %28, %38 : vector<16x32xf32>
    %40 = arith.addf %39, %20 : vector<16x32xf32>
    %41 = arith.truncf %40 : vector<16x32xf32> to vector<16x32xbf16>
    %c0_18 = arith.constant 0 : index
    %c0_19 = arith.constant 0 : index
    %42 = vector.load %arg6[%c0_18, %c0_19] : memref<32x128xbf16, #tpu.memory_space<vmem>>, vector<32x128xbf16>
    %cst_20 = arith.constant dense<0.000000e+00> : vector<16x128xf32>
    %43 = tpu.matmul %41, %42, %cst_20 {dimension_numbers = #tpu.dot_dimension_numbers<[1], [0], [0], [1], [0, 0, 1, 1], [], []>} : vector<16x32xbf16>, vector<32x128xbf16>, vector<16x128xf32> -> vector<16x128xf32>
    %c0_21 = arith.constant 0 : index
    %c0_22 = arith.constant 0 : index
    %44 = vector.load %arg7[%c0_21, %c0_22] : memref<1x128xf32, #tpu.memory_space<vmem>>, vector<1x128xf32>
    %45 = vector.broadcast %44 : vector<1x128xf32> to vector<16x128xf32>
    %46 = arith.addf %43, %45 : vector<16x128xf32>
    %47 = arith.truncf %46 : vector<16x128xf32> to vector<16x128xbf16>
    %c0_23 = arith.constant 0 : index
    %c0_24 = arith.constant 0 : index
    %48 = vector.load %arg8[%c0_23, %c0_24] : memref<16x128xbf16, #tpu.memory_space<vmem>>, vector<16x128xbf16>
    tpu.vector_store %arg8[%c0_23, %c0_24], %47 {strides = array<i32>} : memref<16x128xbf16, #tpu.memory_space<vmem>>, vector<16x128xbf16>,
    return
  }
  func.func @transform_0(%arg0: i32) -> (i32, i32) {
    %c0_i32 = arith.constant 0 : i32
    %c0_i32_0 = arith.constant 0 : i32
    return %arg0, %c0_i32 : i32, i32
  }
  func.func @transform_1(%arg0: i32) -> (i32, i32) {
    %c0_i32 = arith.constant 0 : i32
    %c0_i32_0 = arith.constant 0 : i32
    %c0_i32_1 = arith.constant 0 : i32
    return %c0_i32, %c0_i32_0 : i32, i32
  }
  func.func @transform_2(%arg0: i32) -> (i32, i32) {
    %c0_i32 = arith.constant 0 : i32
    %c0_i32_0 = arith.constant 0 : i32
    %c0_i32_1 = arith.constant 0 : i32
    return %c0_i32, %c0_i32_0 : i32, i32
  }
  func.func @transform_3(%arg0: i32) -> (i32, i32) {
    %c0_i32 = arith.constant 0 : i32
    %c0_i32_0 = arith.constant 0 : i32
    %c0_i32_1 = arith.constant 0 : i32
    return %c0_i32, %c0_i32_0 : i32, i32
  }
  func.func @transform_4(%arg0: i32) -> (i32, i32) {
    %c0_i32 = arith.constant 0 : i32
    %c0_i32_0 = arith.constant 0 : i32
    %c0_i32_1 = arith.constant 0 : i32
    return %c0_i32, %c0_i32_0 : i32, i32
  }
  func.func @transform_5(%arg0: i32) -> (i32, i32) {
    %c0_i32 = arith.constant 0 : i32
    %c0_i32_0 = arith.constant 0 : i32
    %c0_i32_1 = arith.constant 0 : i32
    return %c0_i32, %c0_i32_0 : i32, i32
  }
  func.func @transform_6(%arg0: i32) -> (i32, i32) {
    %c0_i32 = arith.constant 0 : i32
    %c0_i32_0 = arith.constant 0 : i32
    %c0_i32_1 = arith.constant 0 : i32
    return %c0_i32, %c0_i32_0 : i32, i32
  }
  func.func @transform_7(%arg0: i32) -> (i32, i32) {
    %c0_i32 = arith.constant 0 : i32
    %c0_i32_0 = arith.constant 0 : i32
    return %arg0, %c0_i32 : i32, i32
  }
}

</mosaic_0001>

<llo_original>
// kernel: tpu_custom_call.1
$region0: #{tpu_custom_call.1}
  #allocation0 [shape = 'u32[]', space=smem, size = 0x4, offset = 0x4, fixed_abs, tag = 'smem constant byte address 0x4 - core index']
  #allocation1 [shape = 'u32[144,128]{1,0:T(1,128)}', space=vmem, size = 0x12000, scoped, tag = 'internal scratch']
  %s0 = inlined_call_operand.hbm [shape: bf16[16,32], index: 0, kind: input, shape index: {}]
  %s1 = inlined_call_operand.hbm [shape: bf16[32,32], index: 1, kind: input, shape index: {}]
  %s2 = inlined_call_operand.vmem [shape: f32[1,32], index: 2, kind: input, shape index: {}]
  %s3 = inlined_call_operand.hbm [shape: bf16[32,32], index: 3, kind: input, shape index: {}]
  %s4 = inlined_call_operand.vmem [shape: f32[1,32], index: 4, kind: input, shape index: {}]
  %s5 = inlined_call_operand.vmem [shape: bf16[32,128], index: 5, kind: input, shape index: {}]
  %s6 = inlined_call_operand.vmem [shape: f32[1,128], index: 6, kind: input, shape index: {}]
  %s7 = inlined_call_operand.hbm [shape: bf16[16,128], index: 7, kind: output, shape index: {}]
  %s8 = sld [smem:[#allocation0]]
  $region50: #{tpu_custom_call.1} parent=0
    _
  %s10 = ssub.s32 1, %s8
  %s11 = scalar_select 0, %s10, %s8
  $region1: #{tpu_custom_call.1} parent=0
    #allocation2 [shape = 'u8[4096]{0}', space=vmem, size = 0x1000, scoped, tag = 'input window, operand 0, single buffered']
    #allocation3 [shape = 's32[1]{0}', space=sflag, size = 0x4, scoped, tag = 'scoped memory for tpu_custom_call.1']
    #allocation4 [shape = 's32[1]{0}', space=sflag, size = 0x4, scoped, tag = 'scoped memory for tpu_custom_call.1']
    #allocation5 [shape = 'u8[8192]{0}', space=vmem, size = 0x2000, scoped, tag = 'input window, operand 1, single buffered']
    #allocation6 [shape = 's32[1]{0}', space=sflag, size = 0x4, scoped, tag = 'scoped memory for tpu_custom_call.1']
    #allocation7 [shape = 'u8[8192]{0}', space=vmem, size = 0x2000, scoped, tag = 'input window, operand 3, single buffered']
    #allocation8 [shape = 'u8[4096]{0}', space=vmem, size = 0x1000, scoped, tag = 'output window, operand 0, single buffered']
    %12 = vsyncpa [#allocation3], 0
    %13 = vsyncpa [#allocation6], 0
    %14 = vsyncpa [#allocation4], 0
    // Predicated region
    $region2: #{tpu_custom_call.1} parent=1 // pred_check
      _
    $region3: #{tpu_custom_call.1} parent=1 // pred_check_branch
      %16 = sbr.rel (0) target = $region5
    $region4: #{tpu_custom_call.1} parent=1 // pred_region
      %s18 = ssub.s32 128, 128
      %19 = vsyncadd [#allocation3], %s18
      %s20 = sshll.u32 [#allocation2], 4
      %s21 = int_to_ptr.vmem [resolvable:$true] %s20
      %26 = dma.hbm_to_vmem [thread:$0]  %s0, 128, %s21, [#allocation3], 64, 64, 4
    $region5: #{tpu_custom_call.1} parent=1 // pred_fallthru
      _
    // Predicated region
    $region6: #{tpu_custom_call.1} parent=1 // pred_check
      _
    $region7: #{tpu_custom_call.1} parent=1 // pred_check_branch
      %28 = sbr.rel (0) target = $region9
    $region8: #{tpu_custom_call.1} parent=1 // pred_region
      %s30 = ssub.s32 256, 256
      %31 = vsyncadd [#allocation6], %s30
      %s32 = sshll.u32 [#allocation5], 4
      %s33 = int_to_ptr.vmem [resolvable:$true] %s32
      %38 = dma.hbm_to_vmem [thread:$0]  %s1, 256, %s33, [#allocation6], 64, 64, 4
    $region9: #{tpu_custom_call.1} parent=1 // pred_fallthru
      _
    // Predicated region
    $region10: #{tpu_custom_call.1} parent=1 // pred_check
      _
    $region11: #{tpu_custom_call.1} parent=1 // pred_check_branch
      %40 = sbr.rel (0) target = $region13
    $region12: #{tpu_custom_call.1} parent=1 // pred_region
      _
    $region13: #{tpu_custom_call.1} parent=1 // pred_fallthru
      _
    // Predicated region
    $region14: #{tpu_custom_call.1} parent=1 // pred_check
      _
    $region15: #{tpu_custom_call.1} parent=1 // pred_check_branch
      %42 = sbr.rel (0) target = $region17
    $region16: #{tpu_custom_call.1} parent=1 // pred_region
      %s44 = ssub.s32 256, 256
      %45 = vsyncadd [#allocation6], %s44
      %s46 = sshll.u32 [#allocation7], 4
      %s47 = int_to_ptr.vmem [resolvable:$true] %s46
      %52 = dma.hbm_to_vmem [thread:$0]  %s3, 256, %s47, [#allocation6], 64, 64, 4
    $region17: #{tpu_custom_call.1} parent=1 // pred_fallthru
      _
    // Predicated region
    $region18: #{tpu_custom_call.1} parent=1 // pred_check
      _
    $region19: #{tpu_custom_call.1} parent=1 // pred_check_branch
      %54 = sbr.rel (0) target = $region21
    $region20: #{tpu_custom_call.1} parent=1 // pred_region
      _
    $region21: #{tpu_custom_call.1} parent=1 // pred_fallthru
      _
    // Predicated region
    $region22: #{tpu_custom_call.1} parent=1 // pred_check
      _
    $region23: #{tpu_custom_call.1} parent=1 // pred_check_branch
      %56 = sbr.rel (0) target = $region25
    $region24: #{tpu_custom_call.1} parent=1 // pred_region
      _
    $region25: #{tpu_custom_call.1} parent=1 // pred_fallthru
      _
    // Predicated region
    $region26: #{tpu_custom_call.1} parent=1 // pred_check
      _
    $region27: #{tpu_custom_call.1} parent=1 // pred_check_branch
      %58 = sbr.rel (0) target = $region29
    $region28: #{tpu_custom_call.1} parent=1 // pred_region
      _
    $region29: #{tpu_custom_call.1} parent=1 // pred_fallthru
      _
    // Predicated region
    $region30: #{tpu_custom_call.1} parent=1 // pred_check
      _
    $region31: #{tpu_custom_call.1} parent=1 // pred_check_branch
      %60 = sbr.rel (0) target = $region33
    $region32: #{tpu_custom_call.1} parent=1 // pred_region
      %61 = dma.done [#allocation3], 128
    $region33: #{tpu_custom_call.1} parent=1 // pred_fallthru
      _
    // Predicated region
    $region34: #{tpu_custom_call.1} parent=1 // pred_check
      _
    $region35: #{tpu_custom_call.1} parent=1 // pred_check_branch
      %63 = sbr.rel (0) target = $region37
    $region36: #{tpu_custom_call.1} parent=1 // pred_region
      %64 = dma.done [#allocation6], 256
    $region37: #{tpu_custom_call.1} parent=1 // pred_fallthru
      _
    // Predicated region
    $region38: #{tpu_custom_call.1} parent=1 // pred_check
      _
    $region39: #{tpu_custom_call.1} parent=1 // pred_check_branch
      %66 = sbr.rel (0) target = $region41
    $region40: #{tpu_custom_call.1} parent=1 // pred_region
      %67 = dma.done [#allocation6], 256
    $region41: #{tpu_custom_call.1} parent=1 // pred_fallthru
      _
    %v69 = vld [vmem:[#allocation2] sm:$0xf]
    %v70 = vld [vmem:[#allocation2 + $0x4] sm:$0xf]
    %v71 = vunpack.c.l.bf16 %v69
    %v72 = vunpack.c.l.bf16 %v70
    %v73 = vld [vmem:[#allocation5] sm:$0xf]
    %v74 = vld [vmem:[#allocation5 + $0x4] sm:$0xf]
    %v75 = vld [vmem:[#allocation5 + $0x8] sm:$0xf]
    %v76 = vld [vmem:[#allocation5 + $0xc] sm:$0xf]
    %v77 = vld [vmem:[%s2] sm:$0x1]
    %v79 = vlaneseq
    %v80 = vshrl.u32 %v79, 7
    %v81 = vsub.s32 0, %v80
    %v82 = vrot.slane %v77, %v81
    %v86 = vunpack.c.l.b16 %v69
    %v87 = vunpack.c.l.b16 %v70
    %v88 = vpack.c.b16 %v87, %v86
    %v93 = vunpack.c.l.b16 %v73
    %v94 = vunpack.c.l.b16 %v74
    %v95 = vunpack.c.l.b16 %v75
    %v96 = vunpack.c.l.b16 %v76
    %v97 = vpack.c.b16 %v94, %v93
    %v98 = vpack.c.b16 %v96, %v95
    %vm101 = vcmask 261120
    %v103 = vsel %vm101, %v88, 0
    %105 = vmatprep.subr.bf16.mxu0 0
    %106 = vmatpush1.bf16.msra.mxu0 %v97
    %107 = vmatprep.subr.bf16.mxu0 0
    %108 = vmatpush1.bf16.msra.mxu0 %v98
    %109 = vmatprep.subr.bf16.mxu0 0
    %110 = vmatpush1.bf16.msra.mxu0 0
    %111 = vmatprep.subr.bf16.mxu0 0
    %112 = vmatpush1.bf16.msra.mxu0 0
    %113 = vmatprep.subr.bf16.mxu0 0
    %114 = vmatpush1.bf16.msra.mxu0 0
    %115 = vmatprep.subr.bf16.mxu0 0
    %116 = vmatpush1.bf16.msra.mxu0 0
    %117 = vmatprep.subr.bf16.mxu0 0
    %118 = vmatpush1.bf16.msra.mxu0 0
    %119 = vmatprep.subr.bf16.mxu0 0
    %120 = vmatpush1.bf16.msra.mxu0 0
    %121 = vmatprep.subr.bf16.mxu0 0
    %122 = vmatpush1.bf16.msra.mxu0 0
    %123 = vmatprep.subr.bf16.mxu0 0
    %124 = vmatpush1.bf16.msra.mxu0 0
    %125 = vmatprep.subr.bf16.mxu0 0
    %126 = vmatpush1.bf16.msra.mxu0 0
    %127 = vmatprep.subr.bf16.mxu0 0
    %128 = vmatpush1.bf16.msra.mxu0 0
    %129 = vmatprep.subr.bf16.mxu0 0
    %130 = vmatpush1.bf16.msra.mxu0 0
    %131 = vmatprep.subr.bf16.mxu0 0
    %132 = vmatpush1.bf16.msra.mxu0 0
    %133 = vmatprep.subr.bf16.mxu0 0
    %134 = vmatpush1.bf16.msra.mxu0 0
    %135 = vmatprep.subr.bf16.mxu0 0
    %136 = vmatpush1.bf16.msra.mxu0 0
    %137 = vmatprep.mubr.bf16.mxu0 0
    %138 = vmatmul.mubr.bf16.gmra.mrb[0].mxu0 %v103
    %v139 = vpop.f32.mrb[0].mxu0
    %v140 = vadd.f32 %v82, %v139
    %v141 = vpop.f32.mrb[0].mxu0
    %v142 = vpop.f32.mrb[0].mxu0
    %v143 = vadd.f32 %v82, %v142
    %v144 = vpop.f32.mrb[0].mxu0
    %145 = vdwg.mxu0
    %v146 = vmul.f32 %v140, 0.5
    %v147 = vmul.f32 %v143, 0.5
    %v148 = vmul.f32 %v140, %v140
    %v149 = vmul.f32 %v143, %v143
    %v150 = vmul.f32 %v148, %v140
    %v151 = vmul.f32 %v149, %v143
    %v152 = vmul.f32 %v150, 0.044715
    %v153 = vmul.f32 %v151, 0.044715
    %v154 = vadd.f32 %v140, %v152
    %v155 = vadd.f32 %v143, %v153
    %v156 = vmul.f32 %v154, 0.7978846
    %v157 = vmul.f32 %v155, 0.7978846
    %v158 = vtanh.pop %v156
    %v159 = vtanh.pop %v157
    %v160 = vadd.f32 %v158, 1.0
    %v161 = vadd.f32 %v159, 1.0
    %v162 = vmul.f32 %v146, %v160
    %v163 = vmul.f32 %v147, %v161
    %v164 = vadd.f32 %v162, %v71
    %v165 = vadd.f32 %v163, %v72
    %v166 = vpack.c.bf16 %v165, %v164
    %v167 = vld [vmem:[#allocation7] sm:$0xf]
    %v168 = vld [vmem:[#allocation7 + $0x4] sm:$0xf]
    %v169 = vld [vmem:[#allocation7 + $0x8] sm:$0xf]
    %v170 = vld [vmem:[#allocation7 + $0xc] sm:$0xf]
    %v171 = vld [vmem:[%s4] sm:$0x1]
    %v173 = vlaneseq
    %v174 = vshrl.u32 %v173, 7
    %v175 = vsub.s32 0, %v174
    %v176 = vrot.slane %v171, %v175
    %v182 = vunpack.c.l.b16 %v167
    %v183 = vunpack.c.l.b16 %v168
    %v184 = vunpack.c.l.b16 %v169
    %v185 = vunpack.c.l.b16 %v170
    %v186 = vpack.c.b16 %v183, %v182
    %v187 = vpack.c.b16 %v185, %v184
    %v191 = vsel %vm101, %v166, 0
    %193 = vmatprep.subr.bf16.mxu0 0
    %194 = vmatpush1.bf16.msra.mxu0 %v186
    %195 = vmatprep.subr.bf16.mxu0 0
    %196 = vmatpush1.bf16.msra.mxu0 %v187
    %197 = vmatprep.subr.bf16.mxu0 0
    %198 = vmatpush1.bf16.msra.mxu0 0
    %199 = vmatprep.subr.bf16.mxu0 0
    %200 = vmatpush1.bf16.msra.mxu0 0
    %201 = vmatprep.subr.bf16.mxu0 0
    %202 = vmatpush1.bf16.msra.mxu0 0
    %203 = vmatprep.subr.bf16.mxu0 0
    %204 = vmatpush1.bf16.msra.mxu0 0
    %205 = vmatprep.subr.bf16.mxu0 0
    %206 = vmatpush1.bf16.msra.mxu0 0
    %207 = vmatprep.subr.bf16.mxu0 0
    %208 = vmatpush1.bf16.msra.mxu0 0
    %209 = vmatprep.subr.bf16.mxu0 0
    %210 = vmatpush1.bf16.msra.mxu0 0
    %211 = vmatprep.subr.bf16.mxu0 0
    %212 = vmatpush1.bf16.msra.mxu0 0
    %213 = vmatprep.subr.bf16.mxu0 0
    %214 = vmatpush1.bf16.msra.mxu0 0
    %215 = vmatprep.subr.bf16.mxu0 0
    %216 = vmatpush1.bf16.msra.mxu0 0
    %217 = vmatprep.subr.bf16.mxu0 0
    %218 = vmatpush1.bf16.msra.mxu0 0
    %219 = vmatprep.subr.bf16.mxu0 0
    %220 = vmatpush1.bf16.msra.mxu0 0
    %221 = vmatprep.subr.bf16.mxu0 0
    %222 = vmatpush1.bf16.msra.mxu0 0
    %223 = vmatprep.subr.bf16.mxu0 0
    %224 = vmatpush1.bf16.msra.mxu0 0
    %225 = vmatprep.mubr.bf16.mxu0 0
    %226 = vmatmul.mubr.bf16.gmra.mrb[0].mxu0 %v191
    %v227 = vpop.f32.mrb[0].mxu0
    %v228 = vadd.f32 %v176, %v227
    %v229 = vpop.f32.mrb[0].mxu0
    %v230 = vpop.f32.mrb[0].mxu0
    %v231 = vadd.f32 %v176, %v230
    %v232 = vpop.f32.mrb[0].mxu0
    %233 = vdwg.mxu0
    %v234 = vmul.f32 %v228, 0.5
    %v235 = vmul.f32 %v231, 0.5
    %v236 = vmul.f32 %v228, %v228
    %v237 = vmul.f32 %v231, %v231
    %v238 = vmul.f32 %v236, %v228
    %v239 = vmul.f32 %v237, %v231
    %v240 = vmul.f32 %v238, 0.044715
    %v241 = vmul.f32 %v239, 0.044715
    %v242 = vadd.f32 %v228, %v240
    %v243 = vadd.f32 %v231, %v241
    %v244 = vmul.f32 %v242, 0.7978846
    %v245 = vmul.f32 %v243, 0.7978846
    %v246 = vtanh.pop %v244
    %v247 = vtanh.pop %v245
    %v248 = vadd.f32 %v246, 1.0
    %v249 = vadd.f32 %v247, 1.0
    %v250 = vmul.f32 %v234, %v248
    %v251 = vmul.f32 %v235, %v249
    %v252 = vadd.f32 %v250, %v164
    %v253 = vadd.f32 %v251, %v165
    %v254 = vpack.c.bf16 %v253, %v252
    %v255 = vld [vmem:[%s5] sm:$0xf]
    %v256 = vld [vmem:[%s5 + $0x4] sm:$0xf]
    %v257 = vld [vmem:[%s5 + $0x8] sm:$0xf]
    %v258 = vld [vmem:[%s5 + $0xc] sm:$0xf]
    %v259 = vld [vmem:[%s6] sm:$0x1]
    %v261 = vlaneseq
    %v262 = vshrl.u32 %v261, 7
    %v263 = vsub.s32 0, %v262
    %v264 = vrot.slane %v259, %v263
    %v270 = vunpack.c.l.b16 %v255
    %v271 = vunpack.c.l.b16 %v256
    %v272 = vunpack.c.l.b16 %v257
    %v273 = vunpack.c.l.b16 %v258
    %v274 = vpack.c.b16 %v271, %v270
    %v275 = vpack.c.b16 %v273, %v272
    %v279 = vsel %vm101, %v254, 0
    %281 = vmatprep.subr.bf16.mxu0 0
    %282 = vmatpush1.bf16.msra.mxu0 %v274
    %283 = vmatprep.subr.bf16.mxu0 0
    %284 = vmatpush1.bf16.msra.mxu0 %v275
    %285 = vmatprep.subr.bf16.mxu0 0
    %286 = vmatpush1.bf16.msra.mxu0 0
    %287 = vmatprep.subr.bf16.mxu0 0
    %288 = vmatpush1.bf16.msra.mxu0 0
    %289 = vmatprep.subr.bf16.mxu0 0
    %290 = vmatpush1.bf16.msra.mxu0 0
    %291 = vmatprep.subr.bf16.mxu0 0
    %292 = vmatpush1.bf16.msra.mxu0 0
    %293 = vmatprep.subr.bf16.mxu0 0
    %294 = vmatpush1.bf16.msra.mxu0 0
    %295 = vmatprep.subr.bf16.mxu0 0
    %296 = vmatpush1.bf16.msra.mxu0 0
    %297 = vmatprep.subr.bf16.mxu0 0
    %298 = vmatpush1.bf16.msra.mxu0 0
    %299 = vmatprep.subr.bf16.mxu0 0
    %300 = vmatpush1.bf16.msra.mxu0 0
    %301 = vmatprep.subr.bf16.mxu0 0
    %302 = vmatpush1.bf16.msra.mxu0 0
    %303 = vmatprep.subr.bf16.mxu0 0
    %304 = vmatpush1.bf16.msra.mxu0 0
    %305 = vmatprep.subr.bf16.mxu0 0
    %306 = vmatpush1.bf16.msra.mxu0 0
    %307 = vmatprep.subr.bf16.mxu0 0
    %308 = vmatpush1.bf16.msra.mxu0 0
    %309 = vmatprep.subr.bf16.mxu0 0
    %310 = vmatpush1.bf16.msra.mxu0 0
    %311 = vmatprep.subr.bf16.mxu0 0
    %312 = vmatpush1.bf16.msra.mxu0 0
    %313 = vmatprep.mubr.bf16.mxu0 0
    %314 = vmatmul.mubr.bf16.gmra.mrb[0].mxu0 %v279
    %v315 = vpop.f32.mrb[0].mxu0
    %v316 = vadd.f32 %v264, %v315
    %v317 = vpop.f32.mrb[0].mxu0
    %v318 = vpop.f32.mrb[0].mxu0
    %v319 = vadd.f32 %v264, %v318
    %v320 = vpop.f32.mrb[0].mxu0
    %321 = vdwg.mxu0
    %v322 = vpack.c.bf16 %v319, %v316
    %v324 = vunpack.c.l.b16 %v322
    %v325 = vunpack.c.h.b16 %v322
    %v326 = vpack.c.b16 %v324, %v324
    %v327 = vpack.c.b16 %v325, %v325
    %330 = vst [vmem:[#allocation8] sm:$0xf] %v326
    %331 = vst [vmem:[#allocation8 + $0x4] sm:$0xf] %v327
    // Predicated region
    $region42: #{tpu_custom_call.1} parent=1 // pred_check
      _
    $region43: #{tpu_custom_call.1} parent=1 // pred_check_branch
      %333 = sbr.rel (0) target = $region45
    $region44: #{tpu_custom_call.1} parent=1 // pred_region
      %s335 = ssub.s32 128, 128
      %336 = vsyncadd [#allocation4], %s335
      %s337 = sshll.u32 [#allocation8], 4
      %s338 = int_to_ptr.vmem [resolvable:$true] %s337
      %343 = dma.vmem_to_hbm [thread:$0]  %s338, 128, %s7, [#allocation4], 64, 64, 4
    $region45: #{tpu_custom_call.1} parent=1 // pred_fallthru
      _
    // Predicated region
    $region46: #{tpu_custom_call.1} parent=1 // pred_check
      _
    $region47: #{tpu_custom_call.1} parent=1 // pred_check_branch
      %345 = sbr.rel (0) target = $region49
    $region48: #{tpu_custom_call.1} parent=1 // pred_region
      %346 = dma.done [#allocation4], 128
    $region49: #{tpu_custom_call.1} parent=1 // pred_fallthru
      _
    %347 = vsyncpa [#allocation3], 1
    %348 = vsyncpa [#allocation6], 1
    %349 = vsyncpa [#allocation4], 1

</llo_original>
